<compile_context>
chip_gen: v7x
topology: tpu7x:2x2x1
jax: 0.10.0
libtpu: 0.0.40
codegen_flags: <defaults>
</compile_context>

<pallas_src>
import jax
import jax.numpy as jnp
from jax.experimental import pallas as pl
from jax.experimental.pallas import tpu as pltpu


# ---------------------------------------------------------------------------
# Pallas kernels (elementwise hot path)
# ---------------------------------------------------------------------------
def _heaviside_kernel(x_ref, o_ref):
    """spiking=True forward: heaviside step, (x >= 0) cast to output dtype."""
    x = x_ref[...]
    o_ref[...] = (x >= 0).astype(o_ref.dtype)


def _sigmoid_kernel(alpha_ref, x_ref, o_ref):
    """spiking=False forward: sigmoid(alpha*x) == 0.5*tanh(0.5*alpha*x)+0.5.

    alpha_ref: (1,) float32 scalar in SMEM (runtime operand -> no recompiles).
    Single EUP transcendental (tanh) per element; bf16 stays bf16, everything
    else computes in f32.
    """
    x = x_ref[...]
    if x.dtype in (jnp.float32, jnp.bfloat16):
        cdt = x.dtype
    else:
        cdt = jnp.float32
    xc = x.astype(cdt)
    half = jnp.asarray(0.5, cdt)
    half_alpha = (0.5 * alpha_ref[0]).astype(cdt)
    o_ref[...] = (half * jnp.tanh(half_alpha * xc) + half).astype(o_ref.dtype)


# ---------------------------------------------------------------------------
# Wrapper
# ---------------------------------------------------------------------------
_LANE = 128
_WIDE = 1024                            # lane-dense last dim (multiple of 128)
_SMALL_ELEMS = 32 * 1024                # <= 128 KiB f32: single block, no grid
_TARGET_BLOCK_BYTES = 8 * 1024 * 1024   # ~8 MiB per pipelined block (all gens)


def _round_up(v, m):
    return -(-v // m) * m


def surrogate_forward(x, *, alpha: float, spiking: bool):
    """Pallas implementation of SurrogateFunctionBase.forward (Sigmoid semantics).

    x: jnp array of any shape (NCHW in the tests). Returns same shape.
    dtype: preserved, except non-float inputs on the sigmoid path -> float32.
    """
    orig_shape = x.shape
    in_dtype = x.dtype
    if spiking or jnp.issubdtype(in_dtype, jnp.floating):
        out_dtype = in_dtype
    else:
        out_dtype = jnp.float32

    total = int(x.size)
    if total == 0:
        return jnp.zeros(orig_shape, out_dtype)

    in_bytes = jnp.dtype(in_dtype).itemsize
    out_bytes = jnp.dtype(out_dtype).itemsize
    cost = pl.CostEstimate(
        flops=total * (1 if spiking else 3),
        transcendentals=0 if spiking else total,
        bytes_accessed=total * (in_bytes + out_bytes),
    )

    smem_spec = pl.BlockSpec(memory_space=pltpu.MemorySpace.SMEM)
    vmem_spec = pl.BlockSpec(memory_space=pltpu.MemorySpace.VMEM)
    if spiking:
        kernel = _heaviside_kernel
        extra_args = ()
        extra_specs = []
    else:
        kernel = _sigmoid_kernel
        extra_args = (jnp.full((1,), alpha, dtype=jnp.float32),)
        extra_specs = [smem_spec]

    x_flat = jnp.ravel(x)  # contiguous dimension merge: free in XLA

    # ---- Small path: one whole-array block, no grid, no per-step overhead ----
    if total <= _SMALL_ELEMS:
        padded = _round_up(total, 8 * _LANE)
        if padded != total:
            x_flat = jnp.pad(x_flat, (0, padded - total))
        x2d = x_flat.reshape(padded // _LANE, _LANE)
        out2d = pl.pallas_call(
            kernel,
            out_shape=jax.ShapeDtypeStruct(x2d.shape, out_dtype),
            in_specs=extra_specs + [vmem_spec],
            out_specs=vmem_spec,
            cost_estimate=cost,
        )(*extra_args, x2d)
        out_flat = out2d.reshape(-1)
        if padded != total:
            out_flat = out_flat[:total]
        return out_flat.reshape(orig_shape)

    # ---- Tiled path: lane-dense blocks, cdiv grid (partial last block masked) ----
    padded = _round_up(total, _WIDE)
    if padded != total:
        # TODO(synk): a 1-D cdiv-grid kernel would remove this pad/slice copy for
        # lane-unaligned totals; typical SNN activation sizes hit the pad-free path.
        x_flat = jnp.pad(x_flat, (0, padded - total))
    rows = padded // _WIDE
    x2d = x_flat.reshape(rows, _WIDE)

    # Block rows: ~8 MiB per block for large arrays (dtype-aware), ~rows/4 for
    # medium arrays so DMA-in / compute / DMA-out overlap across >= ~4 steps.
    bytes_per_elem = max(in_bytes, out_bytes)
    target_rows = max(8, (_TARGET_BLOCK_BYTES // (_WIDE * bytes_per_elem)) // 8 * 8)
    block_rows = min(target_rows, _round_up(rows // 4, 8))
    grid = (pl.cdiv(rows, block_rows),)

    block_in = block_rows * _WIDE * in_bytes
    block_out = block_rows * _WIDE * out_bytes
    # 2 input + 2 output buffers + headroom; stays under v7x's 64 MiB VMEM.
    vmem_limit = min(60 * 1024 * 1024,
                     max(32 * 1024 * 1024, 2 * (block_in + block_out) + (8 << 20)))

    grid_spec = pltpu.PrefetchScalarGridSpec(
        num_scalar_prefetch=0,
        grid=grid,
        in_specs=extra_specs + [pl.BlockSpec((block_rows, _WIDE), lambda i: (i, 0))],
        out_specs=pl.BlockSpec((block_rows, _WIDE), lambda i: (i, 0)),
    )
    out2d = pl.pallas_call(
        kernel,
        out_shape=jax.ShapeDtypeStruct((rows, _WIDE), out_dtype),
        grid_spec=grid_spec,
        compiler_params=pltpu.CompilerParams(
            dimension_semantics=("parallel",),   # shards grid across v7x's 2 TCs
            vmem_limit_bytes=int(vmem_limit),
        ),
        cost_estimate=cost,
    )(*extra_args, x2d)

    out_flat = out2d.reshape(-1)
    if padded != total:
        out_flat = out_flat[:total]
    return out_flat.reshape(orig_shape)


class SurrogateFunctionBase:
    """JAX/Pallas port of the PyTorch module (concrete Sigmoid-style surrogate)."""

    def __init__(self, alpha, spiking=True):
        self.alpha = float(alpha)
        self.spiking = bool(spiking)

    def set_spiking_mode(self, spiking: bool):
        self.spiking = bool(spiking)

    def extra_repr(self):
        return f"alpha={self.alpha}, spiking={self.spiking}"

    def __call__(self, x):
        return surrogate_forward(x, alpha=self.alpha, spiking=self.spiking)


# ---------------------------------------------------------------------------
# Test
# ---------------------------------------------------------------------------
if __name__ == "__main__":
    root = jax.random.PRNGKey(0)
    k0, k1, k2 = jax.random.split(root, 3)

    # NCHW input, small shape (single-block path)
    x = jax.random.normal(k0, (2, 4, 16, 16), dtype=jnp.float32)

    # spiking=True path: heaviside
    mod = SurrogateFunctionBase(alpha=4.0, spiking=True)
    y_spk = jax.block_until_ready(mod(x))
    ref_spk = (x >= 0).astype(x.dtype)
    assert y_spk.shape == x.shape and y_spk.dtype == x.dtype
    assert jnp.array_equal(y_spk, ref_spk), "heaviside mismatch"

    # spiking=False path: sigmoid(alpha * x)
    mod.set_spiking_mode(False)
    y_prim = jax.block_until_ready(mod(x))
    ref_prim = jax.nn.sigmoid(mod.alpha * x)
    assert jnp.allclose(y_prim, ref_prim, atol=1e-5, rtol=1e-5), "sigmoid mismatch"

    # Medium size -> pipelined tiled path (pad-free, 1024-aligned, 4 blocks).
    x_med = jax.random.normal(k1, (4, 8, 64, 64), dtype=jnp.float32)
    mod_med = SurrogateFunctionBase(alpha=2.0, spiking=False)
    y_med = jax.block_until_ready(mod_med(x_med))
    assert jnp.allclose(y_med, jax.nn.sigmoid(2.0 * x_med), atol=1e-5, rtol=1e-5), \
        "tiled sigmoid mismatch"
    mod_med.set_spiking_mode(True)
    y_med_s = jax.block_until_ready(mod_med(x_med))
    assert jnp.array_equal(y_med_s, (x_med >= 0).astype(x_med.dtype)), \
        "tiled heaviside mismatch"

    # Partial last block (rows not a multiple of block_rows) + bf16 dtype path.
    x_odd = jax.random.normal(k2, (5, 7, 64, 64), dtype=jnp.float32)
    mod_odd = SurrogateFunctionBase(alpha=3.0, spiking=False)
    y_odd = jax.block_until_ready(mod_odd(x_odd))
    assert jnp.allclose(y_odd, jax.nn.sigmoid(3.0 * x_odd), atol=1e-5, rtol=1e-5), \
        "partial-block sigmoid mismatch"
    x_bf16 = x_odd.astype(jnp.bfloat16)
    mod_bf16 = SurrogateFunctionBase(alpha=3.0, spiking=True)
    y_bf16 = jax.block_until_ready(mod_bf16(x_bf16))
    assert y_bf16.dtype == jnp.bfloat16
    assert jnp.array_equal(y_bf16, (x_bf16 >= 0).astype(jnp.bfloat16)), \
        "bf16 heaviside mismatch"

    print("KERNEL_OK")
</pallas_src>

<mosaic_0001>
module attributes {stable_mosaic.version = 11 : i64} {
  func.func @_heaviside_kernel(%arg0: memref<16x128xf32, #tpu.memory_space<vmem>>, %arg1: memref<16x128xf32, #tpu.memory_space<vmem>>) attributes {dimension_semantics = [], scalar_prefetch = 0 : i64, scratch_operands = 0 : i64, tpu.core_type = #tpu.core_type<tc>} {
    %c0 = arith.constant 0 : index
    %c0_0 = arith.constant 0 : index
    %0 = vector.load %arg0[%c0, %c0_0] : memref<16x128xf32, #tpu.memory_space<vmem>>, vector<16x128xf32>
    %cst = arith.constant 0.000000e+00 : f32
    %1 = vector.broadcast %cst : f32 to vector<16x128xf32>
    %2 = arith.cmpf oge, %0, %1 : vector<16x128xf32>
    %3 = arith.extui %2 : vector<16x128xi1> to vector<16x128xi32>
    %4 = arith.sitofp %3 : vector<16x128xi32> to vector<16x128xf32>
    %c0_1 = arith.constant 0 : index
    %c0_2 = arith.constant 0 : index
    %5 = vector.load %arg1[%c0_1, %c0_2] : memref<16x128xf32, #tpu.memory_space<vmem>>, vector<16x128xf32>
    tpu.vector_store %arg1[%c0_1, %c0_2], %4 {strides = array<i32>} : memref<16x128xf32, #tpu.memory_space<vmem>>, vector<16x128xf32>,
    return
  }
}

</mosaic_0001>

<llo_original>
// kernel: tpu_custom_call.1
$region0: #{tpu_custom_call.1}
  #allocation0 [shape = 'u32[]', space=smem, size = 0x4, offset = 0x4, fixed_abs, tag = 'smem constant byte address 0x4 - core index']
  #allocation1 [shape = 'u32[144,128]{1,0:T(1,128)}', space=vmem, size = 0x12000, scoped, tag = 'internal scratch']
  %s0 = inlined_call_operand.hbm [shape: f32[16,128], index: 0, kind: input, shape index: {}]
  %s1 = inlined_call_operand.hbm [shape: f32[16,128], index: 1, kind: output, shape index: {}]
  %s2 = sld [smem:[#allocation0]]
  $region18: #{tpu_custom_call.1} parent=0
    _
  %s4 = ssub.s32 1, %s2
  %s5 = scalar_select 0, %s4, %s2
  $region1: #{tpu_custom_call.1} parent=0
    #allocation2 [shape = 'u8[8192]{0}', space=vmem, size = 0x2000, scoped, tag = 'input window, operand 0, single buffered']
    #allocation3 [shape = 's32[1]{0}', space=sflag, size = 0x4, scoped, tag = 'scoped memory for tpu_custom_call.1']
    #allocation4 [shape = 's32[1]{0}', space=sflag, size = 0x4, scoped, tag = 'scoped memory for tpu_custom_call.1']
    #allocation5 [shape = 'u8[8192]{0}', space=vmem, size = 0x2000, scoped, tag = 'output window, operand 0, single buffered']
    %6 = vsyncpa [#allocation3], 0
    %7 = vsyncpa [#allocation4], 0
    // Predicated region
    $region2: #{tpu_custom_call.1} parent=1 // pred_check
      _
    $region3: #{tpu_custom_call.1} parent=1 // pred_check_branch
      %9 = sbr.rel (0) target = $region5
    $region4: #{tpu_custom_call.1} parent=1 // pred_region
      %s11 = ssub.s32 256, 256
      %12 = vsyncadd [#allocation3], %s11
      %s13 = sshll.u32 [#allocation2], 4
      %s14 = int_to_ptr.vmem [resolvable:$true] %s13
      %19 = dma.hbm_to_vmem [thread:$0]  %s0, 256, %s14, [#allocation3], 128, 128, 8
    $region5: #{tpu_custom_call.1} parent=1 // pred_fallthru
      _
    // Predicated region
    $region6: #{tpu_custom_call.1} parent=1 // pred_check
      _
    $region7: #{tpu_custom_call.1} parent=1 // pred_check_branch
      %21 = sbr.rel (0) target = $region9
    $region8: #{tpu_custom_call.1} parent=1 // pred_region
      %22 = dma.done [#allocation3], 256
    $region9: #{tpu_custom_call.1} parent=1 // pred_fallthru
      _
    %v23 = vld [vmem:[#allocation2] sm:$0xff]
    %v24 = vld [vmem:[#allocation2 + $0x8] sm:$0xff]
    %vm25 = vcmp.ge.f32.partialorder %v23, 0.0
    %vm26 = vcmp.ge.f32.partialorder %v24, 0.0
    %v27 = vsel %vm25, 1, 0
    %v28 = vsel %vm26, 1, 0
    %v29 = vcvt.s32.f32 %v27
    %v30 = vcvt.s32.f32 %v28
    %31 = vst [vmem:[#allocation5] sm:$0xff] %v29
    %32 = vst [vmem:[#allocation5 + $0x8] sm:$0xff] %v30
    // Predicated region
    $region10: #{tpu_custom_call.1} parent=1 // pred_check
      _
    $region11: #{tpu_custom_call.1} parent=1 // pred_check_branch
      %34 = sbr.rel (0) target = $region13
    $region12: #{tpu_custom_call.1} parent=1 // pred_region
      %s36 = ssub.s32 256, 256
      %37 = vsyncadd [#allocation4], %s36
      %s38 = sshll.u32 [#allocation5], 4
      %s39 = int_to_ptr.vmem [resolvable:$true] %s38
      %44 = dma.vmem_to_hbm [thread:$0]  %s39, 256, %s1, [#allocation4], 128, 128, 8
    $region13: #{tpu_custom_call.1} parent=1 // pred_fallthru
      _
    // Predicated region
    $region14: #{tpu_custom_call.1} parent=1 // pred_check
      _
    $region15: #{tpu_custom_call.1} parent=1 // pred_check_branch
      %46 = sbr.rel (0) target = $region17
    $region16: #{tpu_custom_call.1} parent=1 // pred_region
      %47 = dma.done [#allocation4], 256
    $region17: #{tpu_custom_call.1} parent=1 // pred_fallthru
      _
    %48 = vsyncpa [#allocation3], 1
    %49 = vsyncpa [#allocation4], 1

</llo_original>
